<compile_context>
chip_gen: v7x
topology: tpu7x:2x2x1
jax: 0.10.0
libtpu: 0.0.40
codegen_flags: <defaults>
</compile_context>

<pallas_src>
import functools

import jax
import jax.numpy as jnp
from jax.experimental import pallas as pl
from jax.experimental.pallas import tpu as pltpu

KSIZE = 5
PAD = 2
BN_EPS = 1e-5
LANE = 128


def _conv_stats_kernel(p_ref, w_ref, y_ref, s_ref, ss_ref, *, c_keep):
    """Conv tile as a single MXU matmul (channel-major) + BN partial sums for this tile."""
    # w_ref: (C_PAD, KC_PAD), p_ref: (KC_PAD, MT)  ->  y: (C_PAD, MT), M on lanes.
    y = jnp.dot(w_ref[...], p_ref[...], preferred_element_type=jnp.float32)
    y_ref[...] = y[:c_keep, :]                              # thin, un-padded channel write
    s_ref[0] = jnp.sum(y, axis=1, keepdims=True)            # (C_PAD, 1) partial sum
    ss_ref[0] = jnp.sum(y * y, axis=1, keepdims=True)       # (C_PAD, 1) partial sum of sq.


def _bn_prelu_kernel(y_ref, prm_ref, o_ref):
    """Folded BatchNorm (one FMA) + per-channel PReLU on a (C8, MT) lane-dense tile."""
    y = y_ref[...]
    scale = prm_ref[:, 0:1]                                  # (C8, 1), broadcast over lanes
    shift = prm_ref[:, 1:2]
    alpha = prm_ref[:, 2:3]
    z = y * scale + shift
    o_ref[...] = jnp.where(z > 0, z, alpha * z)


def _pick_row_tile(m, kc_pad, c_pad, c8):
    """Largest lane-aligned divisor of M within a VMEM budget; prefer an even tile count."""
    per_row = 4 * (2 * kc_pad + c_pad + 2 * c8)              # dbl-buffered patches + y + out
    budget = 20 * 1024 * 1024
    cap = max(LANE, min(8192, (budget // per_row) // LANE * LANE))
    divs = [d for d in range(LANE, min(m, cap) + 1, LANE) if m % d == 0]
    if not divs:
        return m                                             # single full-extent tile

    def score(d):
        nt = m // d
        return (nt % 2 == 0 and nt >= 2, d >= 2048, d)       # even grid > big tile > size

    return max(divs, key=score)


@jax.jit
def vnet_in_block(x_nchw, w, b, gamma, beta, alpha):
    """Forward pass of VNetInBlock (layers=1).

    x_nchw : (N, Cin, H, W) float32
    w      : (Cout, Cin, 5, 5)   PyTorch Conv2d weight layout (OIHW)
    b, gamma, beta, alpha : (Cout,)
    returns: (N, Cout, H, W) float32
    """
    del b  # conv bias is exactly cancelled by the BN (training-mode) mean subtraction
    N, Cin, H, W = x_nchw.shape
    Cout = w.shape[0]
    M = N * H * W
    KC = KSIZE * KSIZE * Cin
    KC_PAD = ((KC + LANE - 1) // LANE) * LANE                # real zeros pad K -> safe MXU
    C_PAD = ((Cout + LANE - 1) // LANE) * LANE               # matmul N dim (VMEM only)
    C8 = ((Cout + 7) // 8) * 8                               # channels actually written

    MT = _pick_row_tile(M, KC_PAD, C_PAD, C8)
    num_tiles = M // MT

    # ---- transposed im2col, built once by XLA: (KC_PAD, M), K order = (kh, kw, cin) ----
    xc = jnp.transpose(x_nchw.astype(jnp.float32), (1, 0, 2, 3))          # (Cin, N, H, W)
    xp = jnp.pad(xc, ((0, 0), (0, 0), (PAD, PAD), (PAD, PAD)))
    taps = [jax.lax.slice(xp, (0, 0, kh, kw), (Cin, N, kh + H, kw + W))
            for kh in range(KSIZE) for kw in range(KSIZE)]
    patches = jnp.stack(taps, axis=0).reshape(KC, M)
    if KC_PAD > KC:
        patches = jnp.concatenate(
            [patches, jnp.zeros((KC_PAD - KC, M), jnp.float32)], axis=0)

    # ---- conv weight (Cout, Cin, 5, 5) -> (C_PAD, KC_PAD); rows = out channels ----
    wmat = jnp.transpose(w.astype(jnp.float32), (0, 2, 3, 1)).reshape(Cout, KC)
    wmat = jnp.pad(wmat, ((0, C_PAD - Cout), (0, KC_PAD - KC)))

    conv_kernel = functools.partial(_conv_stats_kernel, c_keep=C8)
    cost1 = pl.CostEstimate(
        flops=2 * M * KC_PAD * C_PAD, transcendentals=0,
        bytes_accessed=4 * int(KC_PAD * M + C_PAD * KC_PAD + C8 * M
                               + 2 * num_tiles * C_PAD))

    # Pass 1: conv per M-tile (independent -> "parallel", sharded across v7x's 2 TCs)
    # + per-tile BN partial statistics.  Only thin (C8, MT) activations hit HBM.
    y_t, psum, psumsq = pl.pallas_call(
        conv_kernel,
        out_shape=(jax.ShapeDtypeStruct((C8, M), jnp.float32),
                   jax.ShapeDtypeStruct((num_tiles, C_PAD, 1), jnp.float32),
                   jax.ShapeDtypeStruct((num_tiles, C_PAD, 1), jnp.float32)),
        grid_spec=pltpu.PrefetchScalarGridSpec(
            num_scalar_prefetch=0,
            grid=(num_tiles,),
            in_specs=[
                pl.BlockSpec((KC_PAD, MT), lambda t: (0, t)),
                pl.BlockSpec((C_PAD, KC_PAD), lambda t: (0, 0)),
            ],
            out_specs=[
                pl.BlockSpec((C8, MT), lambda t: (0, t)),
                pl.BlockSpec((1, C_PAD, 1), lambda t: (t, 0, 0)),
                pl.BlockSpec((1, C_PAD, 1), lambda t: (t, 0, 0)),
            ],
        ),
        compiler_params=pltpu.CompilerParams(
            dimension_semantics=("parallel",),
            vmem_limit_bytes=32 * 1024 * 1024),
        cost_estimate=cost1,
    )(patches, wmat)

    # ---- BN finalize: tiny per-channel math on (C8,) vectors (plain jnp is fine) ----
    count = jnp.float32(M)
    s = jnp.sum(psum[:, :C8, 0], axis=0)
    ss = jnp.sum(psumsq[:, :C8, 0], axis=0)
    mean = s / count
    var = jnp.maximum(ss / count - mean * mean, 0.0)   # biased variance (training-mode BN)
    pad8 = lambda v: jnp.pad(v.astype(jnp.float32), (0, C8 - Cout))
    scale = pad8(gamma) * jax.lax.rsqrt(var + BN_EPS)
    shift = pad8(beta) - mean * scale
    params = jnp.stack([scale, shift, pad8(alpha)], axis=1)               # (C8, 3)

    cost2 = pl.CostEstimate(
        flops=4 * M * C8, transcendentals=0,
        bytes_accessed=4 * int(2 * C8 * M + 3 * C8))

    # Pass 2: folded BN + PReLU, in place over the thin channel-major activations.
    out_t = pl.pallas_call(
        _bn_prelu_kernel,
        out_shape=jax.ShapeDtypeStruct((C8, M), jnp.float32),
        grid_spec=pltpu.PrefetchScalarGridSpec(
            num_scalar_prefetch=0,
            grid=(num_tiles,),
            in_specs=[
                pl.BlockSpec((C8, MT), lambda t: (0, t)),
                pl.BlockSpec((C8, 3), lambda t: (0, 0)),
            ],
            out_specs=pl.BlockSpec((C8, MT), lambda t: (0, t)),
        ),
        compiler_params=pltpu.CompilerParams(dimension_semantics=("parallel",)),
        cost_estimate=cost2,
        input_output_aliases={0: 0},
    )(y_t, params)

    # (C8, M) -> (N, Cout, H, W): cheap Cout-sized reshuffle left to XLA.
    out = out_t.reshape(C8, N, H, W)
    return jnp.transpose(out, (1, 0, 2, 3))[:, :Cout]


def _reference(x_nchw, w, b, gamma, beta, alpha):
    """Pure-JAX reference of the PyTorch forward pass (Conv2d -> BN(train) -> PReLU)."""
    y = jax.lax.conv_general_dilated(
        x_nchw, w, window_strides=(1, 1), padding=((PAD, PAD), (PAD, PAD)),
        dimension_numbers=("NCHW", "OIHW", "NCHW"),
        precision=jax.lax.Precision.HIGHEST)
    y = y + b[None, :, None, None]
    mean = y.mean(axis=(0, 2, 3), keepdims=True)
    var = jnp.mean(jnp.square(y - mean), axis=(0, 2, 3), keepdims=True)
    y = (y - mean) * jax.lax.rsqrt(var + BN_EPS)
    y = y * gamma[None, :, None, None] + beta[None, :, None, None]
    return jnp.where(y > 0, y, alpha[None, :, None, None] * y)


if __name__ == "__main__":
    # Small, deterministic config: VNetInBlock(in_channels=4, out_channels=8, layers=1)
    N, Cin, H, W = 2, 4, 16, 16
    Cout = 8

    key = jax.random.PRNGKey(0)
    kx, kw_, kb, kg, kbe = jax.random.split(key, 5)

    x = jax.random.normal(kx, (N, Cin, H, W), dtype=jnp.float32)
    w = jax.random.normal(kw_, (Cout, Cin, KSIZE, KSIZE), dtype=jnp.float32) * 0.1
    b = jax.random.normal(kb, (Cout,), dtype=jnp.float32) * 0.1
    gamma = 1.0 + 0.1 * jax.random.normal(kg, (Cout,), dtype=jnp.float32)
    beta = 0.1 * jax.random.normal(kbe, (Cout,), dtype=jnp.float32)
    alpha = jnp.full((Cout,), 0.25, dtype=jnp.float32)       # PReLU default init

    out = jax.block_until_ready(vnet_in_block(x, w, b, gamma, beta, alpha))
    ref = jax.block_until_ready(_reference(x, w, b, gamma, beta, alpha))

    assert out.shape == (N, Cout, H, W), out.shape
    max_err = float(jnp.max(jnp.abs(out - ref)))
    assert jnp.allclose(out, ref, rtol=1e-3, atol=1e-3), max_err

    print("KERNEL_OK")
</pallas_src>

<mosaic_0001>
module attributes {stable_mosaic.version = 11 : i64} {
  func.func @_conv_stats_kernel(%arg0: i32, %arg1: memref<128x256xf32, #tpu.memory_space<vmem>>, %arg2: memref<128x128xf32, #tpu.memory_space<vmem>>, %arg3: memref<8x256xf32, #tpu.memory_space<vmem>>, %arg4: memref<1x128x1xf32, #tpu.memory_space<vmem>>, %arg5: memref<1x128x1xf32, #tpu.memory_space<vmem>>) attributes {dimension_semantics = [#tpu.dimension_semantics<parallel>], iteration_bounds = array<i64: 2>, scalar_prefetch = 0 : i64, scratch_operands = 0 : i64, tpu.core_type = #tpu.core_type<tc>, window_params = [{transform_indices = @transform_0, window_bounds = array<i64: 128, 256>}, {pipeline_mode = #tpu.pipeline_mode<synchronous>, transform_indices = @transform_1, window_bounds = array<i64: 128, 128>}, {transform_indices = @transform_2, window_bounds = array<i64: 8, 256>}, {transform_indices = @transform_3, window_bounds = array<i64: 1, 128, 1>}, {transform_indices = @transform_4, window_bounds = array<i64: 1, 128, 1>}]} {
    %c0 = arith.constant 0 : index
    %c0_0 = arith.constant 0 : index
    %0 = vector.load %arg2[%c0, %c0_0] : memref<128x128xf32, #tpu.memory_space<vmem>>, vector<128x128xf32>
    %c0_1 = arith.constant 0 : index
    %c0_2 = arith.constant 0 : index
    %1 = vector.load %arg1[%c0_1, %c0_2] : memref<128x256xf32, #tpu.memory_space<vmem>>, vector<128x256xf32>
    %cst = arith.constant dense<0.000000e+00> : vector<128x256xf32>
    %2 = tpu.matmul %0, %1, %cst {dimension_numbers = #tpu.dot_dimension_numbers<[1], [0], [0], [1], [0, 0, 1, 1], [], []>} : vector<128x128xf32>, vector<128x256xf32>, vector<128x256xf32> -> vector<128x256xf32>
    %3 = vector.extract_strided_slice %2 {offsets = [0, 0], sizes = [8, 256], strides = [1, 1]} : vector<128x256xf32> to vector<8x256xf32>
    %c0_3 = arith.constant 0 : index
    %c0_4 = arith.constant 0 : index
    %4 = vector.load %arg3[%c0_3, %c0_4] : memref<8x256xf32, #tpu.memory_space<vmem>>, vector<8x256xf32>
    tpu.vector_store %arg3[%c0_3, %c0_4], %3 {strides = array<i32>} : memref<8x256xf32, #tpu.memory_space<vmem>>, vector<8x256xf32>,
    %cst_5 = arith.constant dense<0.000000e+00> : vector<128xf32>
    %5 = vector.multi_reduction <add>, %2, %cst_5 [1] : vector<128x256xf32> to vector<128xf32>
    %6 = vector.shape_cast %5 : vector<128xf32> to vector<128x1xf32>
    %c0_6 = arith.constant 0 : index
    %c0_7 = arith.constant 0 : index
    %c0_8 = arith.constant 0 : index
    %7 = vector.load %arg4[%c0_6, %c0_7, %c0_8] : memref<1x128x1xf32, #tpu.memory_space<vmem>>, vector<1x128x1xf32>
    %8 = vector.shape_cast %7 : vector<1x128x1xf32> to vector<128x1xf32>
    %9 = vector.shape_cast %6 : vector<128x1xf32> to vector<1x128x1xf32>
    tpu.vector_store %arg4[%c0_6, %c0_7, %c0_8], %9 {strides = array<i32>} : memref<1x128x1xf32, #tpu.memory_space<vmem>>, vector<1x128x1xf32>,
    %10 = arith.mulf %2, %2 : vector<128x256xf32>
    %cst_9 = arith.constant dense<0.000000e+00> : vector<128xf32>
    %11 = vector.multi_reduction <add>, %10, %cst_9 [1] : vector<128x256xf32> to vector<128xf32>
    %12 = vector.shape_cast %11 : vector<128xf32> to vector<128x1xf32>
    %c0_10 = arith.constant 0 : index
    %c0_11 = arith.constant 0 : index
    %c0_12 = arith.constant 0 : index
    %13 = vector.load %arg5[%c0_10, %c0_11, %c0_12] : memref<1x128x1xf32, #tpu.memory_space<vmem>>, vector<1x128x1xf32>
    %14 = vector.shape_cast %13 : vector<1x128x1xf32> to vector<128x1xf32>
    %15 = vector.shape_cast %12 : vector<128x1xf32> to vector<1x128x1xf32>
    tpu.vector_store %arg5[%c0_10, %c0_11, %c0_12], %15 {strides = array<i32>} : memref<1x128x1xf32, #tpu.memory_space<vmem>>, vector<1x128x1xf32>,
    return
  }
  func.func @transform_0(%arg0: i32) -> (i32, i32) {
    %c0_i32 = arith.constant 0 : i32
    %c0_i32_0 = arith.constant 0 : i32
    return %c0_i32, %arg0 : i32, i32
  }
  func.func @transform_1(%arg0: i32) -> (i32, i32) {
    %c0_i32 = arith.constant 0 : i32
    %c0_i32_0 = arith.constant 0 : i32
    %c0_i32_1 = arith.constant 0 : i32
    return %c0_i32, %c0_i32_0 : i32, i32
  }
  func.func @transform_2(%arg0: i32) -> (i32, i32) {
    %c0_i32 = arith.constant 0 : i32
    %c0_i32_0 = arith.constant 0 : i32
    return %c0_i32, %arg0 : i32, i32
  }
  func.func @transform_3(%arg0: i32) -> (i32, i32, i32) {
    %c0_i32 = arith.constant 0 : i32
    %c0_i32_0 = arith.constant 0 : i32
    %c0_i32_1 = arith.constant 0 : i32
    return %arg0, %c0_i32, %c0_i32_0 : i32, i32, i32
  }
  func.func @transform_4(%arg0: i32) -> (i32, i32, i32) {
    %c0_i32 = arith.constant 0 : i32
    %c0_i32_0 = arith.constant 0 : i32
    %c0_i32_1 = arith.constant 0 : i32
    return %arg0, %c0_i32, %c0_i32_0 : i32, i32, i32
  }
}

module attributes {stable_mosaic.version = 11 : i64} {
  func.func @_bn_prelu_kernel(%arg0: i32, %arg1: memref<8x256xf32, #tpu.memory_space<vmem>>, %arg2: memref<8x3xf32, #tpu.memory_space<vmem>>, %arg3: memref<8x256xf32, #tpu.memory_space<vmem>>) attributes {dimension_semantics = [#tpu.dimension_semantics<parallel>], iteration_bounds = array<i64: 2>, scalar_prefetch = 0 : i64, scratch_operands = 0 : i64, tpu.core_type = #tpu.core_type<tc>, window_params = [{transform_indices = @transform_0, window_bounds = array<i64: 8, 256>}, {pipeline_mode = #tpu.pipeline_mode<synchronous>, transform_indices = @transform_1, window_bounds = array<i64: 8, 3>}, {transform_indices = @transform_2, window_bounds = array<i64: 8, 256>}]} {
    %c0 = arith.constant 0 : index
    %c0_0 = arith.constant 0 : index
    %0 = vector.load %arg1[%c0, %c0_0] : memref<8x256xf32, #tpu.memory_space<vmem>>, vector<8x256xf32>
    %c0_1 = arith.constant 0 : index
    %c0_2 = arith.constant 0 : index
    %1 = vector.load %arg2[%c0_1, %c0_2] : memref<8x3xf32, #tpu.memory_space<vmem>>, vector<8x1xf32>
    %c0_3 = arith.constant 0 : index
    %c1 = arith.constant 1 : index
    %2 = vector.load %arg2[%c0_3, %c1] : memref<8x3xf32, #tpu.memory_space<vmem>>, vector<8x1xf32>
    %c0_4 = arith.constant 0 : index
    %c2 = arith.constant 2 : index
    %3 = vector.load %arg2[%c0_4, %c2] : memref<8x3xf32, #tpu.memory_space<vmem>>, vector<8x1xf32>
    %4 = vector.broadcast %1 : vector<8x1xf32> to vector<8x256xf32>
    %5 = arith.mulf %0, %4 : vector<8x256xf32>
    %6 = vector.broadcast %2 : vector<8x1xf32> to vector<8x256xf32>
    %7 = arith.addf %5, %6 : vector<8x256xf32>
    %cst = arith.constant 0.000000e+00 : f32
    %8 = vector.broadcast %cst : f32 to vector<8x256xf32>
    %9 = arith.cmpf ogt, %7, %8 : vector<8x256xf32>
    %10 = vector.broadcast %3 : vector<8x1xf32> to vector<8x256xf32>
    %11 = arith.mulf %10, %7 : vector<8x256xf32>
    %12 = arith.select %9, %7, %11 : vector<8x256xi1>, vector<8x256xf32>
    %c0_5 = arith.constant 0 : index
    %c0_6 = arith.constant 0 : index
    %13 = vector.load %arg3[%c0_5, %c0_6] : memref<8x256xf32, #tpu.memory_space<vmem>>, vector<8x256xf32>
    tpu.vector_store %arg3[%c0_5, %c0_6], %12 {strides = array<i32>} : memref<8x256xf32, #tpu.memory_space<vmem>>, vector<8x256xf32>,
    return
  }
  func.func @transform_0(%arg0: i32) -> (i32, i32) {
    %c0_i32 = arith.constant 0 : i32
    %c0_i32_0 = arith.constant 0 : i32
    return %c0_i32, %arg0 : i32, i32
  }
  func.func @transform_1(%arg0: i32) -> (i32, i32) {
    %c0_i32 = arith.constant 0 : i32
    %c0_i32_0 = arith.constant 0 : i32
    %c0_i32_1 = arith.constant 0 : i32
    return %c0_i32, %c0_i32_0 : i32, i32
  }
  func.func @transform_2(%arg0: i32) -> (i32, i32) {
    %c0_i32 = arith.constant 0 : i32
    %c0_i32_0 = arith.constant 0 : i32
    return %c0_i32, %arg0 : i32, i32
  }
}

</mosaic_0001>

<llo_original>
// kernel: vnet_in_block.3
$region0: #{vnet_in_block.3}
  #allocation0 [shape = 'u32[]', space=smem, size = 0x4, offset = 0x4, fixed_abs, tag = 'smem constant byte address 0x4 - core index']
  #allocation1 [shape = 'u32[144,128]{1,0:T(1,128)}', space=vmem, size = 0x12000, scoped, tag = 'internal scratch']
  %s0 = inlined_call_operand.vmem [shape: f32[8,512], index: 0, kind: input, shape index: {}, may-alias: {0,2}]
  %s1 = inlined_call_operand.vmem [shape: f32[8,3], index: 1, kind: input, shape index: {}]
  %s2 = inlined_call_operand.vmem [shape: f32[8,512], index: 2, kind: output, shape index: {}, may-alias: {0,2}]
  %s3 = sld [smem:[#allocation0]]
  $region41: #{vnet_in_block.3} parent=0
    _
  %s5 = ssub.s32 1, %s3
  %s6 = scalar_select 0, %s5, %s3
  loop: start=0, step=1, limit=4
  $region2: #{vnet_in_block.3} parent=0 // loop_pre_header
    _
  $region3: #{vnet_in_block.3} parent=0 // loop_header
    %s8 = sphi 0, %s12
    %p9 = scmp.ge.s32.totalorder %s8, 4
    %s18 = sphi 0, %s20
    %s21 = sphi 0, %s18
    %s22 = sphi 0, %s21
    %s38 = sphi 0, %s22
    %s42 = sphi 0, %s42
    %s44 = sphi 0, %s42
    %s45 = sphi 0, %s44
    %s59 = sphi 0, %s45
    %s65 = sphi 0, %s67
    %s68 = sphi 0, %s65
    %s69 = sphi 0, %s68
    %s85 = sphi 0, %s69
  $region4: #{vnet_in_block.3} parent=0 // loop_header_branch
    %11 = sbr.rel (%p9) target = $region8
  $region5: #{vnet_in_block.3} parent=0 // loop_body
    %s13 = ssub.s32 %s8, 1
    %s14 = ssub.s32 %s8, 2
    %s15 = sadd.s32 %s8, 1
    %s16 = ssub.s32 %s8, %s15
    %p17 = scmp.eq.s32.totalorder %s16, 0
    %s19 = sadd.s32 %s18, 1
    %s20 = scalar_select %p17, %s18, %s19
    %p23 = pneg %p17
    %p24 = scmp.eq.s32.totalorder %s8, 1
    %p25 = por %p23, %p24
    %p26 = scmp.ne.s32.totalorder %s18, %s21
    %p27 = scmp.eq.s32.totalorder %s8, 0
    %p28 = por %p26, %p27
    %p29 = scmp.ne.s32.totalorder %s18, %s21
    %p30 = scmp.eq.s32.totalorder %s13, 1
    %p31 = por %p29, %p30
    %p32 = scmp.ne.s32.totalorder %s21, %s22
    %p33 = scmp.eq.s32.totalorder %s13, 0
    %p34 = por %p32, %p33
    %p35 = scmp.ne.s32.totalorder %s21, %s22
    %p36 = scmp.eq.s32.totalorder %s14, 1
    %p37 = por %p35, %p36
    %p39 = scmp.ne.s32.totalorder %s22, %s38
    %p40 = scmp.eq.s32.totalorder %s14, 0
    %p41 = por %p39, %p40
    %s43 = sadd.s32 %s42, 1
    %p46 = scmp.eq.s32.totalorder %s8, 1
    %p47 = scmp.ne.s32.totalorder %s42, %s44
    %p48 = scmp.eq.s32.totalorder %s8, 0
    %p49 = por %p47, %p48
    %p50 = scmp.ne.s32.totalorder %s42, %s44
    %p51 = scmp.eq.s32.totalorder %s13, 1
    %p52 = por %p50, %p51
    %p53 = scmp.ne.s32.totalorder %s44, %s45
    %p54 = scmp.eq.s32.totalorder %s13, 0
    %p55 = por %p53, %p54
    %p56 = scmp.ne.s32.totalorder %s44, %s45
    %p57 = scmp.eq.s32.totalorder %s14, 1
    %p58 = por %p56, %p57
    %p60 = scmp.ne.s32.totalorder %s45, %s59
    %p61 = scmp.eq.s32.totalorder %s14, 0
    %p62 = por %p60, %p61
    %s63 = ssub.s32 %s8, %s15
    %p64 = scmp.eq.s32.totalorder %s63, 0
    %s66 = sadd.s32 %s65, 1
    %s67 = scalar_select %p64, %s65, %s66
    %p70 = pneg %p64
    %p71 = scmp.eq.s32.totalorder %s8, 1
    %p72 = por %p70, %p71
    %p73 = scmp.ne.s32.totalorder %s65, %s68
    %p74 = scmp.eq.s32.totalorder %s8, 0
    %p75 = por %p73, %p74
    %p76 = scmp.ne.s32.totalorder %s65, %s68
    %p77 = scmp.eq.s32.totalorder %s13, 1
    %p78 = por %p76, %p77
    %p79 = scmp.ne.s32.totalorder %s68, %s69
    %p80 = scmp.eq.s32.totalorder %s13, 0
    %p81 = por %p79, %p80
    %p82 = scmp.ne.s32.totalorder %s68, %s69
    %p83 = scmp.eq.s32.totalorder %s14, 1
    %p84 = por %p82, %p83
    %p86 = scmp.ne.s32.totalorder %s69, %s85
    %p87 = scmp.eq.s32.totalorder %s14, 0
    %p88 = por %p86, %p87
    %p89 = scmp.le.s32.totalorder 1, %s8
    %p90 = scmp.lt.s32.totalorder %s8, 3
    %p91 = pnand %p89, %p90
    %p92 = pneg %p91
    // Predicated region
    $region9: #{vnet_in_block.3} parent=5 // pred_check
      _
    $region10: #{vnet_in_block.3} parent=5 // pred_check_branch
      %94 = sbr.rel (%p91) target = $region12
    $region11: #{vnet_in_block.3} parent=5 // pred_region
      %s95 = ssub.s32 %s8, 1
      // Predicated region
      $region13: #{vnet_in_block.3} parent=11 // pred_check
        %p96 = pneg %p55
      $region14: #{vnet_in_block.3} parent=11 // pred_check_branch
        %98 = sbr.rel (%p96) target = $region16
      $region15: #{vnet_in_block.3} parent=11 // pred_region
        _
      $region16: #{vnet_in_block.3} parent=11 // pred_fallthru
        _
    $region12: #{vnet_in_block.3} parent=5 // pred_fallthru
      _
    %p99 = scmp.lt.s32.totalorder %s8, 2
    // Predicated region
    $region17: #{vnet_in_block.3} parent=5 // pred_check
      %p100 = pneg %p99
    $region18: #{vnet_in_block.3} parent=5 // pred_check_branch
      %102 = sbr.rel (%p100) target = $region20
    $region19: #{vnet_in_block.3} parent=5 // pred_region
      // Predicated region
      $region21: #{vnet_in_block.3} parent=19 // pred_check
        %p103 = pneg %p28
      $region22: #{vnet_in_block.3} parent=19 // pred_check_branch
        %105 = sbr.rel (%p103) target = $region24
      $region23: #{vnet_in_block.3} parent=19 // pred_region
        %s106 = smul.u32 2, %s8
        %p107 = scmp.lt.s32.totalorder %s106, 3
        %s108 = scalar_select %p107, %s106, 3
        %s109 = smul.addr %s108, 8
        %s110 = scalar_lea.vmem %s0, %s109
        %s111 = smul.u32 2, %s8
      $region24: #{vnet_in_block.3} parent=19 // pred_fallthru
        _
    $region20: #{vnet_in_block.3} parent=5 // pred_fallthru
      _
    %p112 = scmp.le.s32.totalorder 1, %s8
    %p113 = scmp.lt.s32.totalorder %s8, 3
    %p114 = pnand %p112, %p113
    %p115 = pneg %p114
    // Predicated region
    $region25: #{vnet_in_block.3} parent=5 // pred_check
      _
    $region26: #{vnet_in_block.3} parent=5 // pred_check_branch
      %117 = sbr.rel (%p114) target = $region28
    $region27: #{vnet_in_block.3} parent=5 // pred_region
      %s118 = ssub.s32 %s8, 1
      %s119 = smul.u32 2, %s13
      %p120 = scmp.lt.s32.totalorder %s119, 3
      %s121 = scalar_select %p120, %s119, 3
      %s122 = smul.addr %s121, 8
      %s123 = scalar_lea.vmem %s0, %s122
      %p124 = pneg %p34
      %p125 = pneg %p31
      %p126 = pneg %p55
      %p127 = pneg %p52
      %p128 = pneg %p81
      %p129 = pneg %p78
      %s130 = smul.u32 2, %s13
      %p131 = scmp.lt.s32.totalorder %s130, 3
      %s132 = scalar_select %p131, %s130, 3
      %s133 = smul.addr %s132, 8
      %s134 = scalar_lea.vmem %s2, %s133
      %s135 = smul.u32 2, %s13
      %p136 = scmp.lt.s32.totalorder %s135, 3
      %s137 = scalar_select %p136, %s135, 3
      %s138 = smul.addr %s137, 8
      %s139 = scalar_lea.vmem %s0, %s138
      %s140 = smul.u32 2, %s13
      %s141 = smul.u32 2, %s13
      %p142 = scmp.lt.s32.totalorder %s141, 3
      %s143 = scalar_select %p142, %s141, 3
      %s144 = smul.addr %s143, 8
      %s145 = scalar_lea.vmem %s2, %s144
      %s146 = smul.u32 2, %s13
      %v147 = vld [vmem:[%s139] sm:$0xff]
      %v148 = vld [vmem:[%s139 + $0x8] sm:$0xff]
      %v149 = vld [vmem:[%s1] sm:$0xff]
      %151 = vset.pattern.permute.xlu0 0
      %152 = vperm.xlu0 %151, %v149
      %v153 = vpop.permute.xlu0 %152
      %v155 = vmul.f32 %v147, %v153
      %v156 = vmul.f32 %v148, %v153
      %157 = vset.pattern.permute.xlu0 1
      %158 = vperm.xlu0 %157, %v149
      %v159 = vpop.permute.xlu0 %158
      %v161 = vadd.f32 %v155, %v159
      %v162 = vadd.f32 %v156, %v159
      %vm163 = vcmp.gt.f32.partialorder %v161, 0.0
      %vm164 = vcmp.gt.f32.partialorder %v162, 0.0
      %165 = vset.pattern.permute.xlu0 2
      %166 = vperm.xlu0 %165, %v149
      %v167 = vpop.permute.xlu0 %166
      %v169 = vmul.f32 %v167, %v161
      %v170 = vmul.f32 %v167, %v162
      %v171 = vsel %vm163, %v161, %v169
      %v172 = vsel %vm164, %v162, %v170
      %173 = vst [vmem:[%s145] sm:$0xff] %v171
      %174 = vst [vmem:[%s145 + $0x8] sm:$0xff] %v172
      %s175 = smul.u32 2, %s13
      %p176 = scmp.lt.s32.totalorder %s175, 3
      %s177 = scalar_select %p176, %s175, 3
      %s178 = smul.addr %s177, 8
      %s179 = scalar_lea.vmem %s2, %s178
      // Predicated region
      $region29: #{vnet_in_block.3} parent=27 // pred_check
        %p180 = pneg %p78
      $region30: #{vnet_in_block.3} parent=27 // pred_check_branch
        %182 = sbr.rel (%p180) target = $region32
      $region31: #{vnet_in_block.3} parent=27 // pred_region
        %s183 = smul.u32 2, %s13
      $region32: #{vnet_in_block.3} parent=27 // pred_fallthru
        _
    $region28: #{vnet_in_block.3} parent=5 // pred_fallthru
      _
    %p184 = scmp.le.s32.totalorder 2, %s8
    // Predicated region
    $region33: #{vnet_in_block.3} parent=5 // pred_check
      %p185 = pneg %p184
    $region34: #{vnet_in_block.3} parent=5 // pred_check_branch
      %187 = sbr.rel (%p185) target = $region36
    $region35: #{vnet_in_block.3} parent=5 // pred_region
      %s188 = ssub.s32 %s8, 2
      // Predicated region
      $region37: #{vnet_in_block.3} parent=35 // pred_check
        %p189 = pneg %p84
      $region38: #{vnet_in_block.3} parent=35 // pred_check_branch
        %191 = sbr.rel (%p189) target = $region40
      $region39: #{vnet_in_block.3} parent=35 // pred_region
        %s192 = smul.u32 2, %s14
        %p193 = scmp.lt.s32.totalorder %s192, 3
        %s194 = scalar_select %p193, %s192, 3
        %s195 = smul.addr %s194, 8
        %s196 = scalar_lea.vmem %s2, %s195
      $region40: #{vnet_in_block.3} parent=35 // pred_fallthru
        _
    $region36: #{vnet_in_block.3} parent=5 // pred_fallthru
      _
  $region6: #{vnet_in_block.3} parent=0 // loop_footer
    %s12 = sadd.s32 1, %s8
  $region7: #{vnet_in_block.3} parent=0 // loop_footer_branch
    %7 = sbr.rel target = $region3
  $region8: #{vnet_in_block.3} parent=0 // loop_exit
    _

// kernel: vnet_in_block.2
$region0: #{vnet_in_block.2}
  #allocation0 [shape = 'u32[]', space=smem, size = 0x4, offset = 0x4, fixed_abs, tag = 'smem constant byte address 0x4 - core index']
  #allocation1 [shape = 'u32[144,128]{1,0:T(1,128)}', space=vmem, size = 0x12000, scoped, tag = 'internal scratch']
  %s0 = inlined_call_operand.vmem [shape: f32[128,512], index: 0, kind: input, shape index: {}]
  %s1 = inlined_call_operand.vmem [shape: f32[128,128], index: 1, kind: input, shape index: {}]
  %s2 = inlined_call_operand.vmem [shape: f32[8,512], index: 2, kind: output, shape index: {0}]
  %s3 = inlined_call_operand.vmem [shape: f32[2,128,1], index: 3, kind: output, shape index: {1}]
  %s4 = inlined_call_operand.vmem [shape: f32[2,128,1], index: 4, kind: output, shape index: {2}]
  %5 = xla_tuple %s2, %s3, %s4
  %s6 = sld [smem:[#allocation0]]
  $region80: #{vnet_in_block.2} parent=0
    _
  %s8 = ssub.s32 1, %s6
  %s9 = scalar_select 0, %s8, %s6
  $region1: #{vnet_in_block.2} parent=0
    #allocation2 [shape = 'u8[262144]{0}', space=vmem, size = 0x40000, scoped, tag = 'input window, operand 0']
    loop: start=0, step=1, limit=4
    $region2: #{vnet_in_block.2} parent=1 // loop_pre_header
      _
    $region3: #{vnet_in_block.2} parent=1 // loop_header
      %s11 = sphi 0, %s15
      %p12 = scmp.ge.s32.totalorder %s11, 4
      %s21 = sphi 0, %s23
      %s24 = sphi 0, %s21
      %s25 = sphi 0, %s24
      %s41 = sphi 0, %s25
      %s45 = sphi 0, %s45
      %s47 = sphi 0, %s45
      %s48 = sphi 0, %s47
      %s62 = sphi 0, %s48
      %s68 = sphi 0, %s70
      %s71 = sphi 0, %s68
      %s72 = sphi 0, %s71
      %s88 = sphi 0, %s72
      %s94 = sphi 0, %s96
      %s97 = sphi 0, %s94
      %s98 = sphi 0, %s97
      %s114 = sphi 0, %s98
      %s120 = sphi 0, %s122
      %s123 = sphi 0, %s120
      %s124 = sphi 0, %s123
      %s140 = sphi 0, %s124
    $region4: #{vnet_in_block.2} parent=1 // loop_header_branch
      %14 = sbr.rel (%p12) target = $region8
    $region5: #{vnet_in_block.2} parent=1 // loop_body
      %s16 = ssub.s32 %s11, 1
      %s17 = ssub.s32 %s11, 2
      %s18 = sadd.s32 %s11, 1
      %s19 = ssub.s32 %s11, %s18
      %p20 = scmp.eq.s32.totalorder %s19, 0
      %s22 = sadd.s32 %s21, 1
      %s23 = scalar_select %p20, %s21, %s22
      %p26 = pneg %p20
      %p27 = scmp.eq.s32.totalorder %s11, 1
      %p28 = por %p26, %p27
      %p29 = scmp.ne.s32.totalorder %s21, %s24
      %p30 = scmp.eq.s32.totalorder %s11, 0
      %p31 = por %p29, %p30
      %p32 = scmp.ne.s32.totalorder %s21, %s24
      %p33 = scmp.eq.s32.totalorder %s16, 1
      %p34 = por %p32, %p33
      %p35 = scmp.ne.s32.totalorder %s24, %s25
      %p36 = scmp.eq.s32.totalorder %s16, 0
      %p37 = por %p35, %p36
      %p38 = scmp.ne.s32.totalorder %s24, %s25
      %p39 = scmp.eq.s32.totalorder %s17, 1
      %p40 = por %p38, %p39
      %p42 = scmp.ne.s32.totalorder %s25, %s41
      %p43 = scmp.eq.s32.totalorder %s17, 0
      %p44 = por %p42, %p43
      %s46 = sadd.s32 %s45, 1
      %p49 = scmp.eq.s32.totalorder %s11, 1
      %p50 = scmp.ne.s32.totalorder %s45, %s47
      %p51 = scmp.eq.s32.totalorder %s11, 0
      %p52 = por %p50, %p51
      %p53 = scmp.ne.s32.totalorder %s45, %s47
      %p54 = scmp.eq.s32.totalorder %s16, 1
      %p55 = por %p53, %p54
      %p56 = scmp.ne.s32.totalorder %s47, %s48
      %p57 = scmp.eq.s32.totalorder %s16, 0
      %p58 = por %p56, %p57
      %p59 = scmp.ne.s32.totalorder %s47, %s48
      %p60 = scmp.eq.s32.totalorder %s17, 1
      %p61 = por %p59, %p60
      %p63 = scmp.ne.s32.totalorder %s48, %s62
      %p64 = scmp.eq.s32.totalorder %s17, 0
      %p65 = por %p63, %p64
      %s66 = ssub.s32 %s11, %s18
      %p67 = scmp.eq.s32.totalorder %s66, 0
      %s69 = sadd.s32 %s68, 1
      %s70 = scalar_select %p67, %s68, %s69
      %p73 = pneg %p67
      %p74 = scmp.eq.s32.totalorder %s11, 1
      %p75 = por %p73, %p74
      %p76 = scmp.ne.s32.totalorder %s68, %s71
      %p77 = scmp.eq.s32.totalorder %s11, 0
      %p78 = por %p76, %p77
      %p79 = scmp.ne.s32.totalorder %s68, %s71
      %p80 = scmp.eq.s32.totalorder %s16, 1
      %p81 = por %p79, %p80
      %p82 = scmp.ne.s32.totalorder %s71, %s72
      %p83 = scmp.eq.s32.totalorder %s16, 0
      %p84 = por %p82, %p83
      %p85 = scmp.ne.s32.totalorder %s71, %s72
      %p86 = scmp.eq.s32.totalorder %s17, 1
      %p87 = por %p85, %p86
      %p89 = scmp.ne.s32.totalorder %s72, %s88
      %p90 = scmp.eq.s32.totalorder %s17, 0
      %p91 = por %p89, %p90
      %s92 = ssub.s32 %s11, %s18
      %p93 = scmp.eq.s32.totalorder %s92, 0
      %s95 = sadd.s32 %s94, 1
      %s96 = scalar_select %p93, %s94, %s95
      %p99 = pneg %p93
      %p100 = scmp.eq.s32.totalorder %s11, 1
      %p101 = por %p99, %p100
      %p102 = scmp.ne.s32.totalorder %s94, %s97
      %p103 = scmp.eq.s32.totalorder %s11, 0
      %p104 = por %p102, %p103
      %p105 = scmp.ne.s32.totalorder %s94, %s97
      %p106 = scmp.eq.s32.totalorder %s16, 1
      %p107 = por %p105, %p106
      %p108 = scmp.ne.s32.totalorder %s97, %s98
      %p109 = scmp.eq.s32.totalorder %s16, 0
      %p110 = por %p108, %p109
      %p111 = scmp.ne.s32.totalorder %s97, %s98
      %p112 = scmp.eq.s32.totalorder %s17, 1
      %p113 = por %p111, %p112
      %p115 = scmp.ne.s32.totalorder %s98, %s114
      %p116 = scmp.eq.s32.totalorder %s17, 0
      %p117 = por %p115, %p116
      %s118 = ssub.s32 %s11, %s18
      %p119 = scmp.eq.s32.totalorder %s118, 0
      %s121 = sadd.s32 %s120, 1
      %s122 = scalar_select %p119, %s120, %s121
      %p125 = pneg %p119
      %p126 = scmp.eq.s32.totalorder %s11, 1
      %p127 = por %p125, %p126
      %p128 = scmp.ne.s32.totalorder %s120, %s123
      %p129 = scmp.eq.s32.totalorder %s11, 0
      %p130 = por %p128, %p129
      %p131 = scmp.ne.s32.totalorder %s120, %s123
      %p132 = scmp.eq.s32.totalorder %s16, 1
      %p133 = por %p131, %p132
      %p134 = scmp.ne.s32.totalorder %s123, %s124
      %p135 = scmp.eq.s32.totalorder %s16, 0
      %p136 = por %p134, %p135
      %p137 = scmp.ne.s32.totalorder %s123, %s124
      %p138 = scmp.eq.s32.totalorder %s17, 1
      %p139 = por %p137, %p138
      %p141 = scmp.ne.s32.totalorder %s124, %s140
      %p142 = scmp.eq.s32.totalorder %s17, 0
      %p143 = por %p141, %p142
      %p144 = scmp.le.s32.totalorder 1, %s11
      %p145 = scmp.lt.s32.totalorder %s11, 3
      %p146 = pnand %p144, %p145
      %p147 = pneg %p146
      // Predicated region
      $region9: #{vnet_in_block.2} parent=5 // pred_check
        _
      $region10: #{vnet_in_block.2} parent=5 // pred_check_branch
        %149 = sbr.rel (%p146) target = $region12
      $region11: #{vnet_in_block.2} parent=5 // pred_region
        %s150 = ssub.s32 %s11, 1
        // Predicated region
        $region13: #{vnet_in_block.2} parent=11 // pred_check
          %p151 = pneg %p58
        $region14: #{vnet_in_block.2} parent=11 // pred_check_branch
          %153 = sbr.rel (%p151) target = $region16
        $region15: #{vnet_in_block.2} parent=11 // pred_region
          _
        $region16: #{vnet_in_block.2} parent=11 // pred_fallthru
          _
      $region12: #{vnet_in_block.2} parent=5 // pred_fallthru
        _
      %p154 = scmp.lt.s32.totalorder %s11, 2
      // Predicated region
      $region17: #{vnet_in_block.2} parent=5 // pred_check
        %p155 = pneg %p154
      $region18: #{vnet_in_block.2} parent=5 // pred_check_branch
        %157 = sbr.rel (%p155) target = $region20
      $region19: #{vnet_in_block.2} parent=5 // pred_region
        // Predicated region
        $region21: #{vnet_in_block.2} parent=19 // pred_check
          %p158 = pneg %p31
        $region22: #{vnet_in_block.2} parent=19 // pred_check_branch
          %160 = sbr.rel (%p158) target = $region24
        $region23: #{vnet_in_block.2} parent=19 // pred_region
          %s161 = sand.u32 %s21, 1
          %s162 = sand.u32 %s21, 1
          %s163 = smul.addr %s162, 256
          %s164 = scalar_lea.vmem [#allocation2], %s163
          %s165 = smul.u32 2, %s11
          %s166 = smul.addr %s165, 8
          %s167 = scalar_lea.vmem %s0, %s166
          // Predicated region
          $region25: #{vnet_in_block.2} parent=23 // pred_check
            _
          $region26: #{vnet_in_block.2} parent=23 // pred_check_branch
            %169 = sbr.rel (0) target = $region28
          $region27: #{vnet_in_block.2} parent=23 // pred_region
            // Predicated region
            $region29: #{vnet_in_block.2} parent=27 // pred_check
              _
            $region30: #{vnet_in_block.2} parent=27 // pred_check_branch
              %171 = sbr.rel (0) target = $region32
            $region31: #{vnet_in_block.2} parent=27 // pred_region
              loop: start=0, step=1, limit=1
              $region33: #{vnet_in_block.2} parent=31 // loop_pre_header
                _
              $region34: #{vnet_in_block.2} parent=31 // loop_header
                %s173 = sphi 0, %s177
                %p174 = scmp.ge.s32.totalorder %s173, 1
                %s178 = sphi %s167, %s167
                %s179 = sphi %s164, %s164
              $region35: #{vnet_in_block.2} parent=31 // loop_header_branch
                %176 = sbr.rel (%p174) target = $region39
              $region36: #{vnet_in_block.2} parent=31 // loop_body
                %v180 = vld [vmem:[%s178] sm:$0xff]
                %181 = vst [vmem:[%s179] sm:$0xff] %v180
                %v182 = vld [vmem:[%s178 + $0x8] sm:$0xff]
                %183 = vst [vmem:[%s179 + $0x8] sm:$0xff] %v182
                %v184 = vld [vmem:[%s178 + $0x20] sm:$0xff]
                %185 = vst [vmem:[%s179 + $0x10] sm:$0xff] %v184
                %v186 = vld [vmem:[%s178 + $0x28] sm:$0xff]
                %187 = vst [vmem:[%s179 + $0x18] sm:$0xff] %v186
                %v188 = vld [vmem:[%s178 + $0x40] sm:$0xff]
                %189 = vst [vmem:[%s179 + $0x20] sm:$0xff] %v188
                %v190 = vld [vmem:[%s178 + $0x48] sm:$0xff]
                %191 = vst [vmem:[%s179 + $0x28] sm:$0xff] %v190
                %v192 = vld [vmem:[%s178 + $0x60] sm:$0xff]
                %193 = vst [vmem:[%s179 + $0x30] sm:$0xff] %v192
                %v194 = vld [vmem:[%s178 + $0x68] sm:$0xff]
                %195 = vst [vmem:[%s179 + $0x38] sm:$0xff] %v194
                %v196 = vld [vmem:[%s178 + $0x80] sm:$0xff]
                %197 = vst [vmem:[%s179 + $0x40] sm:$0xff] %v196
                %v198 = vld [vmem:[%s178 + $0x88] sm:$0xff]
                %199 = vst [vmem:[%s179 + $0x48] sm:$0xff] %v198
                %v200 = vld [vmem:[%s178 + $0xa0] sm:$0xff]
                %201 = vst [vmem:[%s179 + $0x50] sm:$0xff] %v200
                %v202 = vld [vmem:[%s178 + $0xa8] sm:$0xff]
                %203 = vst [vmem:[%s179 + $0x58] sm:$0xff] %v202
                %v204 = vld [vmem:[%s178 + $0xc0] sm:$0xff]
                %205 = vst [vmem:[%s179 + $0x60] sm:$0xff] %v204
                %v206 = vld [vmem:[%s178 + $0xc8] sm:$0xff]
                %207 = vst [vmem:[%s179 + $0x68] sm:$0xff] %v206
                %v208 = vld [vmem:[%s178 + $0xe0] sm:$0xff]
                %209 = vst [vmem:[%s179 + $0x70] sm:$0xff] %v208
                %v210 = vld [vmem:[%s178 + $0xe8] sm:$0xff]
                %211 = vst [vmem:[%s179 + $0x78] sm:$0xff] %v210
                %v212 = vld [vmem:[%s178 + $0x100] sm:$0xff]
                %213 = vst [vmem:[%s179 + $0x80] sm:$0xff] %v212
                %v214 = vld [vmem:[%s178 + $0x108] sm:$0xff]
                %215 = vst [vmem:[%s179 + $0x88] sm:$0xff] %v214
                %v216 = vld [vmem:[%s178 + $0x120] sm:$0xff]
                %217 = vst [vmem:[%s179 + $0x90] sm:$0xff] %v216
                %v218 = vld [vmem:[%s178 + $0x128] sm:$0xff]
                %219 = vst [vmem:[%s179 + $0x98] sm:$0xff] %v218
                %v220 = vld [vmem:[%s178 + $0x140] sm:$0xff]
                %221 = vst [vmem:[%s179 + $0xa0] sm:$0xff] %v220
                %v222 = vld [vmem:[%s178 + $0x148] sm:$0xff]
                %223 = vst [vmem:[%s179 + $0xa8] sm:$0xff] %v222
                %v224 = vld [vmem:[%s178 + $0x160] sm:$0xff]
                %225 = vst [vmem:[%s179 + $0xb0] sm:$0xff] %v224
                %v226 = vld [vmem:[%s178 + $0x168] sm:$0xff]
                %227 = vst [vmem:[%s179 + $0xb8] sm:$0xff] %v226
                %v228 = vld [vmem:[%s178 + $0x180] sm:$0xff]
                %229 = vst [vmem:[%s179 + $0xc0] sm:$0xff] %v228
                %v230 = vld [vmem:[%s178 + $0x188] sm:$0xff]
                %231 = vst [vmem:[%s179 + $0xc8] sm:$0xff] %v230
                %v232 = vld [vmem:[%s178 + $0x1a0] sm:$0xff]
                %233 = vst [vmem:[%s179 + $0xd0] sm:$0xff] %v232
                %v234 = vld [vmem:[%s178 + $0x1a8] sm:$0xff]
                %235 = vst [vmem:[%s179 + $0xd8] sm:$0xff] %v234
                %v236 = vld [vmem:[%s178 + $0x1c0] sm:$0xff]
                %237 = vst [vmem:[%s179 + $0xe0] sm:$0xff] %v236
                %v238 = vld [vmem:[%s178 + $0x1c8] sm:$0xff]
                %239 = vst [vmem:[%s179 + $0xe8] sm:$0xff] %v238
                %v240 = vld [vmem:[%s178 + $0x1e0] sm:$0xff]
                %241 = vst [vmem:[%s179 + $0xf0] sm:$0xff] %v240
                %v242 = vld [vmem:[%s178 + $0x1e8] sm:$0xff]
                %243 = vst [vmem:[%s179 + $0xf8] sm:$0xff] %v242
              $region37: #{vnet_in_block.2} parent=31 // loop_footer
                %s177 = sadd.s32 1, %s173
              $region38: #{vnet_in_block.2} parent=31 // loop_footer_branch
                %172 = sbr.rel target = $region34
              $region39: #{vnet_in_block.2} parent=31 // loop_exit
                _
            $region32: #{vnet_in_block.2} parent=27 // pred_fallthru
              _
            // Predicated region
            $region40: #{vnet_in_block.2} parent=27 // pred_check
              _
            $region41: #{vnet_in_block.2} parent=27 // pred_check_branch
              %245 = sbr.rel target = $region43
            $region42: #{vnet_in_block.2} parent=27 // pred_region
              _
            $region43: #{vnet_in_block.2} parent=27 // pred_fallthru
              _
          $region28: #{vnet_in_block.2} parent=23 // pred_fallthru
            _
          %246 = vnop
        $region24: #{vnet_in_block.2} parent=19 // pred_fallthru
          _
      $region20: #{vnet_in_block.2} parent=5 // pred_fallthru
        _
      %p247 = scmp.le.s32.totalorder 1, %s11
      %p248 = scmp.lt.s32.totalorder %s11, 3
      %p249 = pnand %p247, %p248
      %p250 = pneg %p249
      // Predicated region
      $region44: #{vnet_in_block.2} parent=5 // pred_check
        _
      $region45: #{vnet_in_block.2} parent=5 // pred_check_branch
        %252 = sbr.rel (%p249) target = $region47
      $region46: #{vnet_in_block.2} parent=5 // pred_region
        %s253 = ssub.s32 %s11, 1
        %s254 = sand.u32 %s24, 1
        %s255 = sand.u32 %s24, 1
        %s256 = smul.addr %s255, 256
        %s257 = scalar_lea.vmem [#allocation2], %s256
        // Predicated region
        $region48: #{vnet_in_block.2} parent=46 // pred_check
          %p258 = pneg %p37
        $region49: #{vnet_in_block.2} parent=46 // pred_check_branch
          %260 = sbr.rel (%p258) target = $region51
        $region50: #{vnet_in_block.2} parent=46 // pred_region
          _
        $region51: #{vnet_in_block.2} parent=46 // pred_fallthru
          _
        %s261 = sand.u32 %s24, 1
        %s262 = sand.u32 %s24, 1
        %s263 = smul.addr %s262, 256
        %s264 = scalar_lea.vmem [#allocation2], %s263
        %p265 = pneg %p37
        %p266 = pneg %p34
        %p267 = pneg %p58
        %p268 = pneg %p55
        %p269 = pneg %p84
        %p270 = pneg %p81
        %s271 = smul.u32 2, %s16
        %p272 = scmp.lt.s32.totalorder %s271, 3
        %s273 = scalar_select %p272, %s271, 3
        %s274 = smul.addr %s273, 8
        %s275 = scalar_lea.vmem %s2, %s274
        %p276 = pneg %p110
        %p277 = pneg %p107
        %p278 = scmp.lt.s32.totalorder %s16, 1
        %s279 = scalar_select %p278, %s16, 1
        %s280 = smul.addr %s279, 16
        %s281 = smul.addr %s280, 8
        %s282 = scalar_lea.vmem %s3, %s281
        %p283 = pneg %p136
        %p284 = pneg %p133
        %p285 = scmp.lt.s32.totalorder %s16, 1
        %s286 = scalar_select %p285, %s16, 1
        %s287 = smul.addr %s286, 16
        %s288 = smul.addr %s287, 8
        %s289 = scalar_lea.vmem %s4, %s288
        %s290 = smul.u32 2, %s16
        %s291 = smul.u32 2, %s16
        %p292 = scmp.lt.s32.totalorder %s291, 3
        %s293 = scalar_select %p292, %s291, 3
        %s294 = smul.addr %s293, 8
        %s295 = scalar_lea.vmem %s2, %s294
        %s296 = smul.u32 2, %s16
        %p297 = scmp.lt.s32.totalorder %s16, 1
        %s298 = scalar_select %p297, %s16, 1
        %s299 = smul.addr %s298, 16
        %s300 = smul.addr %s299, 8
        %s301 = scalar_lea.vmem %s3, %s300
        %p302 = scmp.lt.s32.totalorder %s16, 1
        %s303 = scalar_select %p302, %s16, 1
        %s304 = smul.addr %s303, 16
        %s305 = smul.addr %s304, 8
        %s306 = scalar_lea.vmem %s4, %s305
        %v307 = vld [vmem:[%s1] sm:$0xff]
        %v308 = vld [vmem:[%s1 + $0x8] sm:$0xff]
        %v309 = vld [vmem:[%s1 + $0x10] sm:$0xff]
        %v310 = vld [vmem:[%s1 + $0x18] sm:$0xff]
        %v311 = vld [vmem:[%s1 + $0x20] sm:$0xff]
        %v312 = vld [vmem:[%s1 + $0x28] sm:$0xff]
        %v313 = vld [vmem:[%s1 + $0x30] sm:$0xff]
        %v314 = vld [vmem:[%s1 + $0x38] sm:$0xff]
        %v315 = vld [vmem:[%s1 + $0x40] sm:$0xff]
        %v316 = vld [vmem:[%s1 + $0x48] sm:$0xff]
        %v317 = vld [vmem:[%s1 + $0x50] sm:$0xff]
        %v318 = vld [vmem:[%s1 + $0x58] sm:$0xff]
        %v319 = vld [vmem:[%s1 + $0x60] sm:$0xff]
        %v320 = vld [vmem:[%s1 + $0x68] sm:$0xff]
        %v321 = vld [vmem:[%s1 + $0x70] sm:$0xff]
        %v322 = vld [vmem:[%s1 + $0x78] sm:$0xff]
        %v323 = vld [vmem:[%s257] sm:$0xff]
        %v324 = vld [vmem:[%s257 + $0x8] sm:$0xff]
        %v325 = vld [vmem:[%s257 + $0x10] sm:$0xff]
        %v326 = vld [vmem:[%s257 + $0x18] sm:$0xff]
        %v327 = vld [vmem:[%s257 + $0x20] sm:$0xff]
        %v328 = vld [vmem:[%s257 + $0x28] sm:$0xff]
        %v329 = vld [vmem:[%s257 + $0x30] sm:$0xff]
        %v330 = vld [vmem:[%s257 + $0x38] sm:$0xff]
        %v331 = vld [vmem:[%s257 + $0x40] sm:$0xff]
        %v332 = vld [vmem:[%s257 + $0x48] sm:$0xff]
        %v333 = vld [vmem:[%s257 + $0x50] sm:$0xff]
        %v334 = vld [vmem:[%s257 + $0x58] sm:$0xff]
        %v335 = vld [vmem:[%s257 + $0x60] sm:$0xff]
        %v336 = vld [vmem:[%s257 + $0x68] sm:$0xff]
        %v337 = vld [vmem:[%s257 + $0x70] sm:$0xff]
        %v338 = vld [vmem:[%s257 + $0x78] sm:$0xff]
        %v339 = vld [vmem:[%s257 + $0x80] sm:$0xff]
        %v340 = vld [vmem:[%s257 + $0x88] sm:$0xff]
        %v341 = vld [vmem:[%s257 + $0x90] sm:$0xff]
        %v342 = vld [vmem:[%s257 + $0x98] sm:$0xff]
        %v343 = vld [vmem:[%s257 + $0xa0] sm:$0xff]
        %v344 = vld [vmem:[%s257 + $0xa8] sm:$0xff]
        %v345 = vld [vmem:[%s257 + $0xb0] sm:$0xff]
        %v346 = vld [vmem:[%s257 + $0xb8] sm:$0xff]
        %v347 = vld [vmem:[%s257 + $0xc0] sm:$0xff]
        %v348 = vld [vmem:[%s257 + $0xc8] sm:$0xff]
        %v349 = vld [vmem:[%s257 + $0xd0] sm:$0xff]
        %v350 = vld [vmem:[%s257 + $0xd8] sm:$0xff]
        %v351 = vld [vmem:[%s257 + $0xe0] sm:$0xff]
        %v352 = vld [vmem:[%s257 + $0xe8] sm:$0xff]
        %v353 = vld [vmem:[%s257 + $0xf0] sm:$0xff]
        %v354 = vld [vmem:[%s257 + $0xf8] sm:$0xff]
        %355 = vmatprep.subr.mxu0 %v324
        %356 = vmatpush1.msra.mxu0 %v323
        %357 = vmatprep.subr.mxu0 %v326
        %358 = vmatpush1.msra.mxu0 %v325
        %359 = vmatprep.subr.mxu0 %v328
        %360 = vmatpush1.msra.mxu0 %v327
        %361 = vmatprep.subr.mxu0 %v330
        %362 = vmatpush1.msra.mxu0 %v329
        %363 = vmatprep.subr.mxu0 %v332
        %364 = vmatpush1.msra.mxu0 %v331
        %365 = vmatprep.subr.mxu0 %v334
        %366 = vmatpush1.msra.mxu0 %v333
        %367 = vmatprep.subr.mxu0 %v336
        %368 = vmatpush1.msra.mxu0 %v335
        %369 = vmatprep.subr.mxu0 %v338
        %370 = vmatpush1.msra.mxu0 %v337
        %371 = vmatprep.subr.mxu0 %v340
        %372 = vmatpush1.msra.mxu0 %v339
        %373 = vmatprep.subr.mxu0 %v342
        %374 = vmatpush1.msra.mxu0 %v341
        %375 = vmatprep.subr.mxu0 %v344
        %376 = vmatpush1.msra.mxu0 %v343
        %377 = vmatprep.subr.mxu0 %v346
        %378 = vmatpush1.msra.mxu0 %v345
        %379 = vmatprep.subr.mxu0 %v348
        %380 = vmatpush1.msra.mxu0 %v347
        %381 = vmatprep.subr.mxu0 %v350
        %382 = vmatpush1.msra.mxu0 %v349
        %383 = vmatprep.subr.mxu0 %v352
        %384 = vmatpush1.msra.mxu0 %v351
        %385 = vmatprep.subr.mxu0 %v354
        %386 = vmatpush1.msra.mxu0 %v353
        %387 = vmatprep.subr.mxu0 0.0
        %388 = vmatpush1.msra.mxu0 0.0
        %389 = vmatprep.subr.mxu0 0.0
        %390 = vmatpush1.msra.mxu0 0.0
        %391 = vmatprep.subr.mxu0 0.0
        %392 = vmatpush1.msra.mxu0 0.0
        %393 = vmatprep.subr.mxu0 0.0
        %394 = vmatpush1.msra.mxu0 0.0
        %395 = vmatprep.subr.mxu0 0.0
        %396 = vmatpush1.msra.mxu0 0.0
        %397 = vmatprep.subr.mxu0 0.0
        %398 = vmatpush1.msra.mxu0 0.0
        %399 = vmatprep.subr.mxu0 0.0
        %400 = vmatpush1.msra.mxu0 0.0
        %401 = vmatprep.subr.mxu0 0.0
        %402 = vmatpush1.msra.mxu0 0.0
        %403 = vmatprep.subr.mxu0 0.0
        %404 = vmatpush1.msra.mxu0 0.0
        %405 = vmatprep.subr.mxu0 0.0
        %406 = vmatpush1.msra.mxu0 0.0
        %407 = vmatprep.subr.mxu0 0.0
        %408 = vmatpush1.msra.mxu0 0.0
        %409 = vmatprep.subr.mxu0 0.0
        %410 = vmatpush1.msra.mxu0 0.0
        %411 = vmatprep.subr.mxu0 0.0
        %412 = vmatpush1.msra.mxu0 0.0
        %413 = vmatprep.subr.mxu0 0.0
        %414 = vmatpush1.msra.mxu0 0.0
        %415 = vmatprep.subr.mxu0 0.0
        %416 = vmatpush1.msra.mxu0 0.0
        %417 = vmatprep.subr.mxu0 0.0
        %418 = vmatpush1.msra.mxu0 0.0
        %419 = vmatprep.mubr.f32.mxu0 0.0
        %420 = vmatmul.mubr.f32.gmra.mrb[0].mxu0 %v307
        %v421 = vpop.f32.mrb[0].mxu0
        %v422 = vadd.f32 0.0, %v421
        %v423 = vpop.f32.mrb[0].mxu0
        %v424 = vadd.f32 0.0, %v423
        %425 = vmatprep.mubr.f32.mxu0 0.0
        %426 = vmatmul.mubr.f32.gmra.mrb[0].mxu0 %v308
        %v427 = vpop.f32.mrb[0].mxu0
        %v428 = vadd.f32 0.0, %v427
        %v429 = vpop.f32.mrb[0].mxu0
        %v430 = vadd.f32 0.0, %v429
        %431 = vmatprep.mubr.f32.mxu0 0.0
        %432 = vmatmul.mubr.f32.gmra.mrb[0].mxu0 %v309
        %v433 = vpop.f32.mrb[0].mxu0
        %v434 = vadd.f32 0.0, %v433
        %v435 = vpop.f32.mrb[0].mxu0
        %v436 = vadd.f32 0.0, %v435
        %437 = vmatprep.mubr.f32.mxu0 0.0
        %438 = vmatmul.mubr.f32.gmra.mrb[0].mxu0 %v310
        %v439 = vpop.f32.mrb[0].mxu0
        %v440 = vadd.f32 0.0, %v439
        %v441 = vpop.f32.mrb[0].mxu0
        %v442 = vadd.f32 0.0, %v441
        %443 = vmatprep.mubr.f32.mxu0 0.0
        %444 = vmatmul.mubr.f32.gmra.mrb[0].mxu0 %v311
        %v445 = vpop.f32.mrb[0].mxu0
        %v446 = vadd.f32 0.0, %v445
        %v447 = vpop.f32.mrb[0].mxu0
        %v448 = vadd.f32 0.0, %v447
        %449 = vmatprep.mubr.f32.mxu0 0.0
        %450 = vmatmul.mubr.f32.gmra.mrb[0].mxu0 %v312
        %v451 = vpop.f32.mrb[0].mxu0
        %v452 = vadd.f32 0.0, %v451
        %v453 = vpop.f32.mrb[0].mxu0
        %v454 = vadd.f32 0.0, %v453
        %455 = vmatprep.mubr.f32.mxu0 0.0
        %456 = vmatmul.mubr.f32.gmra.mrb[0].mxu0 %v313
        %v457 = vpop.f32.mrb[0].mxu0
        %v458 = vadd.f32 0.0, %v457
        %v459 = vpop.f32.mrb[0].mxu0
        %v460 = vadd.f32 0.0, %v459
        %461 = vmatprep.mubr.f32.mxu0 0.0
        %462 = vmatmul.mubr.f32.gmra.mrb[0].mxu0 %v314
        %v463 = vpop.f32.mrb[0].mxu0
        %v464 = vadd.f32 0.0, %v463
        %v465 = vpop.f32.mrb[0].mxu0
        %v466 = vadd.f32 0.0, %v465
        %467 = vmatprep.mubr.f32.mxu0 0.0
        %468 = vmatmul.mubr.f32.gmra.mrb[0].mxu0 %v315
        %v469 = vpop.f32.mrb[0].mxu0
        %v470 = vadd.f32 0.0, %v469
        %v471 = vpop.f32.mrb[0].mxu0
        %v472 = vadd.f32 0.0, %v471
        %473 = vmatprep.mubr.f32.mxu0 0.0
        %474 = vmatmul.mubr.f32.gmra.mrb[0].mxu0 %v316
        %v475 = vpop.f32.mrb[0].mxu0
        %v476 = vadd.f32 0.0, %v475
        %v477 = vpop.f32.mrb[0].mxu0
        %v478 = vadd.f32 0.0, %v477
        %479 = vmatprep.mubr.f32.mxu0 0.0
        %480 = vmatmul.mubr.f32.gmra.mrb[0].mxu0 %v317
        %v481 = vpop.f32.mrb[0].mxu0
        %v482 = vadd.f32 0.0, %v481
        %v483 = vpop.f32.mrb[0].mxu0
        %v484 = vadd.f32 0.0, %v483
        %485 = vmatprep.mubr.f32.mxu0 0.0
        %486 = vmatmul.mubr.f32.gmra.mrb[0].mxu0 %v318
        %v487 = vpop.f32.mrb[0].mxu0
        %v488 = vadd.f32 0.0, %v487
        %v489 = vpop.f32.mrb[0].mxu0
        %v490 = vadd.f32 0.0, %v489
        %491 = vmatprep.mubr.f32.mxu0 0.0
        %492 = vmatmul.mubr.f32.gmra.mrb[0].mxu0 %v319
        %v493 = vpop.f32.mrb[0].mxu0
        %v494 = vadd.f32 0.0, %v493
        %v495 = vpop.f32.mrb[0].mxu0
        %v496 = vadd.f32 0.0, %v495
        %497 = vmatprep.mubr.f32.mxu0 0.0
        %498 = vmatmul.mubr.f32.gmra.mrb[0].mxu0 %v320
        %v499 = vpop.f32.mrb[0].mxu0
        %v500 = vadd.f32 0.0, %v499
        %v501 = vpop.f32.mrb[0].mxu0
        %v502 = vadd.f32 0.0, %v501
        %503 = vmatprep.mubr.f32.mxu0 0.0
        %504 = vmatmul.mubr.f32.gmra.mrb[0].mxu0 %v321
        %v505 = vpop.f32.mrb[0].mxu0
        %v506 = vadd.f32 0.0, %v505
        %v507 = vpop.f32.mrb[0].mxu0
        %v508 = vadd.f32 0.0, %v507
        %509 = vmatprep.mubr.f32.mxu0 0.0
        %510 = vmatmul.mubr.f32.gmra.mrb[0].mxu0 %v322
        %v511 = vpop.f32.mrb[0].mxu0
        %v512 = vadd.f32 0.0, %v511
        %v513 = vpop.f32.mrb[0].mxu0
        %v514 = vadd.f32 0.0, %v513
        %515 = vdwg.mxu0
        %516 = vst [vmem:[%s295] sm:$0xff] %v422
        %517 = vst [vmem:[%s295 + $0x8] sm:$0xff] %v424
        %v518 = vadd.f32 %v422, %v424
        %519 = vadd.xlane.f32.xlu0 %v518
        %v520 = vpop.xlane.xlu0 %519
        %v521 = vadd.f32 %v428, %v430
        %522 = vadd.xlane.f32.xlu0 %v521
        %v523 = vpop.xlane.xlu0 %522
        %v524 = vadd.f32 %v434, %v436
        %525 = vadd.xlane.f32.xlu0 %v524
        %v526 = vpop.xlane.xlu0 %525
        %v527 = vadd.f32 %v440, %v442
        %528 = vadd.xlane.f32.xlu0 %v527
        %v529 = vpop.xlane.xlu0 %528
        %v530 = vadd.f32 %v446, %v448
        %531 = vadd.xlane.f32.xlu0 %v530
        %v532 = vpop.xlane.xlu0 %531
        %v533 = vadd.f32 %v452, %v454
        %534 = vadd.xlane.f32.xlu0 %v533
        %v535 = vpop.xlane.xlu0 %534
        %v536 = vadd.f32 %v458, %v460
        %537 = vadd.xlane.f32.xlu0 %v536
        %v538 = vpop.xlane.xlu0 %537
        %v539 = vadd.f32 %v464, %v466
        %540 = vadd.xlane.f32.xlu0 %v539
        %v541 = vpop.xlane.xlu0 %540
        %v542 = vadd.f32 %v470, %v472
        %543 = vadd.xlane.f32.xlu0 %v542
        %v544 = vpop.xlane.xlu0 %543
        %v545 = vadd.f32 %v476, %v478
        %546 = vadd.xlane.f32.xlu0 %v545
        %v547 = vpop.xlane.xlu0 %546
        %v548 = vadd.f32 %v482, %v484
        %549 = vadd.xlane.f32.xlu0 %v548
        %v550 = vpop.xlane.xlu0 %549
        %v551 = vadd.f32 %v488, %v490
        %552 = vadd.xlane.f32.xlu0 %v551
        %v553 = vpop.xlane.xlu0 %552
        %v554 = vadd.f32 %v494, %v496
        %555 = vadd.xlane.f32.xlu0 %v554
        %v556 = vpop.xlane.xlu0 %555
        %v557 = vadd.f32 %v500, %v502
        %558 = vadd.xlane.f32.xlu0 %v557
        %v559 = vpop.xlane.xlu0 %558
        %v560 = vadd.f32 %v506, %v508
        %561 = vadd.xlane.f32.xlu0 %v560
        %v562 = vpop.xlane.xlu0 %561
        %v563 = vadd.f32 %v512, %v514
        %564 = vadd.xlane.f32.xlu0 %v563
        %v565 = vpop.xlane.xlu0 %564
        %vm566 = vcmask 7168
        %567 = vst.msk [vmem:[%s301] sm:$0xff] %vm566, %v520
        %568 = vst.msk [vmem:[%s301 + $0x8] sm:$0xff] %vm566, %v523
        %569 = vst.msk [vmem:[%s301 + $0x10] sm:$0xff] %vm566, %v526
        %570 = vst.msk [vmem:[%s301 + $0x18] sm:$0xff] %vm566, %v529
        %571 = vst.msk [vmem:[%s301 + $0x20] sm:$0xff] %vm566, %v532
        %572 = vst.msk [vmem:[%s301 + $0x28] sm:$0xff] %vm566, %v535
        %573 = vst.msk [vmem:[%s301 + $0x30] sm:$0xff] %vm566, %v538
        %574 = vst.msk [vmem:[%s301 + $0x38] sm:$0xff] %vm566, %v541
        %575 = vst.msk [vmem:[%s301 + $0x40] sm:$0xff] %vm566, %v544
        %576 = vst.msk [vmem:[%s301 + $0x48] sm:$0xff] %vm566, %v547
        %577 = vst.msk [vmem:[%s301 + $0x50] sm:$0xff] %vm566, %v550
        %578 = vst.msk [vmem:[%s301 + $0x58] sm:$0xff] %vm566, %v553
        %579 = vst.msk [vmem:[%s301 + $0x60] sm:$0xff] %vm566, %v556
        %580 = vst.msk [vmem:[%s301 + $0x68] sm:$0xff] %vm566, %v559
        %581 = vst.msk [vmem:[%s301 + $0x70] sm:$0xff] %vm566, %v562
        %582 = vst.msk [vmem:[%s301 + $0x78] sm:$0xff] %vm566, %v565
        %v583 = vmul.f32 %v422, %v422
        %v584 = vmul.f32 %v424, %v424
        %v585 = vmul.f32 %v428, %v428
        %v586 = vmul.f32 %v430, %v430
        %v587 = vmul.f32 %v434, %v434
        %v588 = vmul.f32 %v436, %v436
        %v589 = vmul.f32 %v440, %v440
        %v590 = vmul.f32 %v442, %v442
        %v591 = vmul.f32 %v446, %v446
        %v592 = vmul.f32 %v448, %v448
        %v593 = vmul.f32 %v452, %v452
        %v594 = vmul.f32 %v454, %v454
        %v595 = vmul.f32 %v458, %v458
        %v596 = vmul.f32 %v460, %v460
        %v597 = vmul.f32 %v464, %v464
        %v598 = vmul.f32 %v466, %v466
        %v599 = vmul.f32 %v470, %v470
        %v600 = vmul.f32 %v472, %v472
        %v601 = vmul.f32 %v476, %v476
        %v602 = vmul.f32 %v478, %v478
        %v603 = vmul.f32 %v482, %v482
        %v604 = vmul.f32 %v484, %v484
        %v605 = vmul.f32 %v488, %v488
        %v606 = vmul.f32 %v490, %v490
        %v607 = vmul.f32 %v494, %v494
        %v608 = vmul.f32 %v496, %v496
        %v609 = vmul.f32 %v500, %v500
        %v610 = vmul.f32 %v502, %v502
        %v611 = vmul.f32 %v506, %v506
        %v612 = vmul.f32 %v508, %v508
        %v613 = vmul.f32 %v512, %v512
        %v614 = vmul.f32 %v514, %v514
        %v615 = vadd.f32 %v583, %v584
        %616 = vadd.xlane.f32.xlu0 %v615
        %v617 = vpop.xlane.xlu0 %616
        %v618 = vadd.f32 %v585, %v586
        %619 = vadd.xlane.f32.xlu0 %v618
        %v620 = vpop.xlane.xlu0 %619
        %v621 = vadd.f32 %v587, %v588
        %622 = vadd.xlane.f32.xlu0 %v621
        %v623 = vpop.xlane.xlu0 %622
        %v624 = vadd.f32 %v589, %v590
        %625 = vadd.xlane.f32.xlu0 %v624
        %v626 = vpop.xlane.xlu0 %625
        %v627 = vadd.f32 %v591, %v592
        %628 = vadd.xlane.f32.xlu0 %v627
        %v629 = vpop.xlane.xlu0 %628
        %v630 = vadd.f32 %v593, %v594
        %631 = vadd.xlane.f32.xlu0 %v630
        %v632 = vpop.xlane.xlu0 %631
        %v633 = vadd.f32 %v595, %v596
        %634 = vadd.xlane.f32.xlu0 %v633
        %v635 = vpop.xlane.xlu0 %634
        %v636 = vadd.f32 %v597, %v598
        %637 = vadd.xlane.f32.xlu0 %v636
        %v638 = vpop.xlane.xlu0 %637
        %v639 = vadd.f32 %v599, %v600
        %640 = vadd.xlane.f32.xlu0 %v639
        %v641 = vpop.xlane.xlu0 %640
        %v642 = vadd.f32 %v601, %v602
        %643 = vadd.xlane.f32.xlu0 %v642
        %v644 = vpop.xlane.xlu0 %643
        %v645 = vadd.f32 %v603, %v604
        %646 = vadd.xlane.f32.xlu0 %v645
        %v647 = vpop.xlane.xlu0 %646
        %v648 = vadd.f32 %v605, %v606
        %649 = vadd.xlane.f32.xlu0 %v648
        %v650 = vpop.xlane.xlu0 %649
        %v651 = vadd.f32 %v607, %v608
        %652 = vadd.xlane.f32.xlu0 %v651
        %v653 = vpop.xlane.xlu0 %652
        %v654 = vadd.f32 %v609, %v610
        %655 = vadd.xlane.f32.xlu0 %v654
        %v656 = vpop.xlane.xlu0 %655
        %v657 = vadd.f32 %v611, %v612
        %658 = vadd.xlane.f32.xlu0 %v657
        %v659 = vpop.xlane.xlu0 %658
        %v660 = vadd.f32 %v613, %v614
        %661 = vadd.xlane.f32.xlu0 %v660
        %v662 = vpop.xlane.xlu0 %661
        %663 = vst.msk [vmem:[%s306] sm:$0xff] %vm566, %v617
        %664 = vst.msk [vmem:[%s306 + $0x8] sm:$0xff] %vm566, %v620
        %665 = vst.msk [vmem:[%s306 + $0x10] sm:$0xff] %vm566, %v623
        %666 = vst.msk [vmem:[%s306 + $0x18] sm:$0xff] %vm566, %v626
        %667 = vst.msk [vmem:[%s306 + $0x20] sm:$0xff] %vm566, %v629
        %668 = vst.msk [vmem:[%s306 + $0x28] sm:$0xff] %vm566, %v632
        %669 = vst.msk [vmem:[%s306 + $0x30] sm:$0xff] %vm566, %v635
        %670 = vst.msk [vmem:[%s306 + $0x38] sm:$0xff] %vm566, %v638
        %671 = vst.msk [vmem:[%s306 + $0x40] sm:$0xff] %vm566, %v641
        %672 = vst.msk [vmem:[%s306 + $0x48] sm:$0xff] %vm566, %v644
        %673 = vst.msk [vmem:[%s306 + $0x50] sm:$0xff] %vm566, %v647
        %674 = vst.msk [vmem:[%s306 + $0x58] sm:$0xff] %vm566, %v650
        %675 = vst.msk [vmem:[%s306 + $0x60] sm:$0xff] %vm566, %v653
        %676 = vst.msk [vmem:[%s306 + $0x68] sm:$0xff] %vm566, %v656
        %677 = vst.msk [vmem:[%s306 + $0x70] sm:$0xff] %vm566, %v659
        %678 = vst.msk [vmem:[%s306 + $0x78] sm:$0xff] %vm566, %v662
        %s679 = smul.u32 2, %s16
        %p680 = scmp.lt.s32.totalorder %s679, 3
        %s681 = scalar_select %p680, %s679, 3
        %s682 = smul.addr %s681, 8
        %s683 = scalar_lea.vmem %s2, %s682
        %p684 = scmp.lt.s32.totalorder %s16, 1
        %s685 = scalar_select %p684, %s16, 1
        %s686 = smul.addr %s685, 16
        %s687 = smul.addr %s686, 8
        %s688 = scalar_lea.vmem %s3, %s687
        %p689 = scmp.lt.s32.totalorder %s16, 1
        %s690 = scalar_select %p689, %s16, 1
        %s691 = smul.addr %s690, 16
        %s692 = smul.addr %s691, 8
        %s693 = scalar_lea.vmem %s4, %s692
        // Predicated region
        $region52: #{vnet_in_block.2} parent=46 // pred_check
          %p694 = pneg %p81
        $region53: #{vnet_in_block.2} parent=46 // pred_check_branch
          %696 = sbr.rel (%p694) target = $region55
        $region54: #{vnet_in_block.2} parent=46 // pred_region
          %s697 = smul.u32 2, %s16
        $region55: #{vnet_in_block.2} parent=46 // pred_fallthru
          _
        // Predicated region
        $region56: #{vnet_in_block.2} parent=46 // pred_check
          %p698 = pneg %p107
        $region57: #{vnet_in_block.2} parent=46 // pred_check_branch
          %700 = sbr.rel (%p698) target = $region59
        $region58: #{vnet_in_block.2} parent=46 // pred_region
          _
        $region59: #{vnet_in_block.2} parent=46 // pred_fallthru
          _
        // Predicated region
        $region60: #{vnet_in_block.2} parent=46 // pred_check
          %p701 = pneg %p133
        $region61: #{vnet_in_block.2} parent=46 // pred_check_branch
          %703 = sbr.rel (%p701) target = $region63
        $region62: #{vnet_in_block.2} parent=46 // pred_region
          _
        $region63: #{vnet_in_block.2} parent=46 // pred_fallthru
          _
      $region47: #{vnet_in_block.2} parent=5 // pred_fallthru
        _
      %p704 = scmp.le.s32.totalorder 2, %s11
      // Predicated region
      $region64: #{vnet_in_block.2} parent=5 // pred_check
        %p705 = pneg %p704
      $region65: #{vnet_in_block.2} parent=5 // pred_check_branch
        %707 = sbr.rel (%p705) target = $region67
      $region66: #{vnet_in_block.2} parent=5 // pred_region
        %s708 = ssub.s32 %s11, 2
        // Predicated region
        $region68: #{vnet_in_block.2} parent=66 // pred_check
          %p709 = pneg %p87
        $region69: #{vnet_in_block.2} parent=66 // pred_check_branch
          %711 = sbr.rel (%p709) target = $region71
        $region70: #{vnet_in_block.2} parent=66 // pred_region
          %s712 = smul.u32 2, %s17
          %p713 = scmp.lt.s32.totalorder %s712, 3
          %s714 = scalar_select %p713, %s712, 3
          %s715 = smul.addr %s714, 8
          %s716 = scalar_lea.vmem %s2, %s715
        $region71: #{vnet_in_block.2} parent=66 // pred_fallthru
          _
        // Predicated region
        $region72: #{vnet_in_block.2} parent=66 // pred_check
          %p717 = pneg %p113
        $region73: #{vnet_in_block.2} parent=66 // pred_check_branch
          %719 = sbr.rel (%p717) target = $region75
        $region74: #{vnet_in_block.2} parent=66 // pred_region
          %p720 = scmp.lt.s32.totalorder %s17, 1
          %s721 = scalar_select %p720, %s17, 1
          %s722 = smul.addr %s721, 16
          %s723 = smul.addr %s722, 8
          %s724 = scalar_lea.vmem %s3, %s723
        $region75: #{vnet_in_block.2} parent=66 // pred_fallthru
          _
        // Predicated region
        $region76: #{vnet_in_block.2} parent=66 // pred_check
          %p725 = pneg %p139
        $region77: #{vnet_in_block.2} parent=66 // pred_check_branch
          %727 = sbr.rel (%p725) target = $region79
        $region78: #{vnet_in_block.2} parent=66 // pred_region
          %p728 = scmp.lt.s32.totalorder %s17, 1
          %s729 = scalar_select %p728, %s17, 1
          %s730 = smul.addr %s729, 16
          %s731 = smul.addr %s730, 8
          %s732 = scalar_lea.vmem %s4, %s731
        $region79: #{vnet_in_block.2} parent=66 // pred_fallthru
          _
      $region67: #{vnet_in_block.2} parent=5 // pred_fallthru
        _
    $region6: #{vnet_in_block.2} parent=1 // loop_footer
      %s15 = sadd.s32 1, %s11
    $region7: #{vnet_in_block.2} parent=1 // loop_footer_branch
      %10 = sbr.rel target = $region3
    $region8: #{vnet_in_block.2} parent=1 // loop_exit
      _

</llo_original>
